<compile_context>
chip_gen: v7x
topology: tpu7x:2x2x1
jax: 0.10.0
libtpu: 0.0.40
codegen_flags: <defaults>
</compile_context>

<pallas_src>
import jax
import jax.numpy as jnp
from jax.experimental import pallas as pl
from jax.experimental.pallas import tpu as pltpu

_EPS = 1e-8            # matches torch F.cosine_similarity eps
_EPS_SQ = _EPS * _EPS  # rsqrt(max(sumsq, eps^2)) == 1/max(norm, eps)


def _make_video_loss_kernel(loss_k, B, N):
    """Kernel factory: loss_k and the mean normalizers are compile-time consts."""
    inv_pairs = 1.0 / float(B * N * N)   # mean over [B, num_way, num_way]
    inv_rows = 1.0 / float(B * N)        # mean over B*num_way rows

    def kernel(x_ref, lb_ref, bid_ref, feat_ref, out_ref, acc_ref):
        # x_ref/feat_ref: [TB, N, C] f32 (VMEM)   lb_ref/bid_ref: [TB, N, 1] f32
        # out_ref: (4,) f32 SMEM                  acc_ref: (3,) f32 SMEM scratch
        TB, n, C = x_ref.shape
        M = TB * n
        step = pl.program_id(0)
        last = pl.num_programs(0) - 1

        @pl.when(step == 0)
        def _init():
            acc_ref[0] = jnp.float32(0.0)
            acc_ref[1] = jnp.float32(0.0)
            acc_ref[2] = jnp.float32(0.0)

        # Fold the batch tile into one lane-dense [M, C] slab.
        x = x_ref[...].reshape(M, C)
        feat = feat_ref[...].reshape(M, C)
        lb_col = lb_ref[...].reshape(M, 1)
        bid_col = bid_ref[...].reshape(M, 1)

        # --- row normalization via rsqrt (EUP slot, no divides) ---
        inv_nx = jax.lax.rsqrt(
            jnp.maximum(jnp.sum(x * x, axis=-1, keepdims=True), _EPS_SQ))
        xn = x * inv_nx                                     # [M, C] unit rows

        # --- single folded Gram matmul: bf16 in / f32 accumulate on the MXU ---
        xn_b = xn.astype(jnp.bfloat16)
        xn_bT = xn.T.astype(jnp.bfloat16)                   # [C, M]
        cos_full = jnp.dot(xn_b, xn_bT,
                           preferred_element_type=jnp.float32)   # [M, M]

        # --- label / same-batch masks (cross-batch entries are masked out) ---
        bidT = jnp.broadcast_to(bid_col, (M, M)).T
        lbT = jnp.broadcast_to(lb_col, (M, M)).T
        same_b = (bid_col == bidT).astype(jnp.float32)            # block-diag mask
        label_mat = jnp.where(lb_col == lbT, same_b, 0.0)         # label eq & same batch

        # di >= 1 (diagonal always matches); factored per-row rsqrt weight.
        di = jnp.sum(label_mat, axis=1, keepdims=True)            # [M, 1]
        rdi = jax.lax.rsqrt(di)
        rdiT = jnp.broadcast_to(rdi, (M, M)).T
        w = (rdi * rdiT) * same_b                                 # 1/sqrt(di_i*di_j), masked

        diff = cos_full - label_mat
        acc_ref[0] = acc_ref[0] + jnp.sum(diff * diff * w)        # weighted SSE
        acc_ref[1] = acc_ref[1] + jnp.sum(jnp.abs(diff) * same_b) # sum |diff|

        # --- feature cosine loss contribution (reuses normalized xn) ---
        inv_nf = jax.lax.rsqrt(
            jnp.maximum(jnp.sum(feat * feat, axis=-1, keepdims=True), _EPS_SQ))
        acc_ref[2] = acc_ref[2] + jnp.sum(
            jnp.sum(xn * feat, axis=-1, keepdims=True) * inv_nf)

        @pl.when(step == last)
        def _finalize():
            mse = acc_ref[0] * inv_pairs
            prec1 = acc_ref[1] * inv_pairs
            floss = -acc_ref[2] * inv_rows
            out_ref[0] = mse
            out_ref[1] = prec1
            out_ref[2] = floss
            out_ref[3] = loss_k * mse + floss

    return kernel


def _choose_tb(B, N, C):
    """Largest divisor of B such that the folded Gram dim M=TB*N stays MXU-sized
    (<= 256) and double-buffered inputs + [M,M] temporaries fit a conservative
    ~16 MiB budget (safe for v7x's 64 MiB VMEM as well as v5e/v6e)."""
    budget = 16 * 1024 * 1024
    best = 1
    for tb in range(1, B + 1):
        if B % tb:
            continue
        m = tb * N
        if m > 256:
            break
        in_bytes = 2 * 2 * tb * N * C * 4      # x & feat, 2x double-buffered
        tmp_bytes = 6 * m * m * 4              # [M,M] f32 temporaries
        if in_bytes + tmp_bytes <= budget:
            best = tb
    return best


def video_loss_forward(x_in, label, audio_feature, loss_k, feature_loss=True):
    """Pallas equivalent of VideoLoss.forward.

    x_in:          [B, num_way, 1, C]
    label:         [B, num_way, 1]
    audio_feature: [B*num_way, C]
    loss_k:        static Python scalar (baked into the kernel)
    Returns (nloss, prec1, [mse_loss, feature_loss]) as JAX scalars.
    """
    B, N, S, C = x_in.shape
    assert S == 1
    x = jnp.reshape(x_in, (B, N, C)).astype(jnp.float32)
    lb = jnp.reshape(label, (B, N, 1)).astype(jnp.float32)
    feat = jnp.reshape(audio_feature, (B, N, C)).astype(jnp.float32)
    # Per-row batch id, so the folded [M,M] Gram matrix can be masked back to
    # the per-batch block diagonal inside the kernel.
    bid = jnp.broadcast_to(
        jnp.arange(B, dtype=jnp.float32)[:, None, None], (B, N, 1))

    TB = _choose_tb(B, N, C)
    grid = (B // TB,)
    kernel = _make_video_loss_kernel(float(loss_k), B, N)

    # NOTE: on v7x the batch grid could additionally be split across the two
    # TensorCores (leading parallel axis + per-core partial sums combined in
    # JAX); kept single-core "arbitrary" reduction here for portability.
    out = pl.pallas_call(
        kernel,
        out_shape=jax.ShapeDtypeStruct((4,), jnp.float32),
        grid_spec=pltpu.PrefetchScalarGridSpec(
            num_scalar_prefetch=0,
            grid=grid,
            in_specs=[
                pl.BlockSpec((TB, N, C), lambda i: (i, 0, 0)),  # x
                pl.BlockSpec((TB, N, 1), lambda i: (i, 0, 0)),  # label
                pl.BlockSpec((TB, N, 1), lambda i: (i, 0, 0)),  # batch id
                pl.BlockSpec((TB, N, C), lambda i: (i, 0, 0)),  # audio feature
            ],
            out_specs=pl.BlockSpec(memory_space=pltpu.SMEM),
            scratch_shapes=[pltpu.SMEM((3,), jnp.float32)],
        ),
        compiler_params=pltpu.CompilerParams(
            dimension_semantics=("arbitrary",),
            vmem_limit_bytes=32 * 1024 * 1024,
        ),
    )(x, lb, bid, feat)

    mse_loss, prec1, feat_loss_v, nloss_feat = out[0], out[1], out[2], out[3]
    if feature_loss:
        return nloss_feat, prec1, [mse_loss, feat_loss_v]
    else:
        return mse_loss, prec1, [mse_loss, jnp.float32(0.0)]


def _reference_forward(x_in, label, audio_feature, loss_k):
    # Pure-JAX reference (f32, highest precision) mirroring PyTorch semantics.
    B, N, S, C = x_in.shape
    x = jnp.reshape(x_in, (B, N, C)).astype(jnp.float32)
    lb = jnp.reshape(label, (B, N)).astype(jnp.float32)
    feat = jnp.reshape(audio_feature, (B, N, C)).astype(jnp.float32)

    xn = x / jnp.maximum(jnp.linalg.norm(x, axis=-1, keepdims=True), _EPS)
    cos = jnp.einsum("bic,bjc->bij", xn, xn,
                     precision=jax.lax.Precision.HIGHEST)
    L = (lb[:, :, None] == lb[:, None, :]).astype(jnp.float32)
    di = L.sum(2)
    dij = di[:, :, None] * di[:, None, :]
    mse = jnp.mean((cos - L) ** 2 / jnp.sqrt(dij))
    prec1 = jnp.mean(jnp.abs(cos - L))
    fn = feat / jnp.maximum(jnp.linalg.norm(feat, axis=-1, keepdims=True), _EPS)
    floss = -jnp.mean(jnp.sum(xn * fn, axis=-1))
    return loss_k * mse + floss, prec1, mse, floss


if __name__ == "__main__":
    key = jax.random.PRNGKey(0)
    B, num_way, num_shot, C = 2, 8, 1, 32
    k1, k2, k3 = jax.random.split(key, 3)

    x_in = jax.random.normal(k1, (B, num_way, num_shot, C), dtype=jnp.float32)
    # integer class labels per way (stored as float, equality semantics preserved)
    label = jax.random.randint(k2, (B, num_way, 1), 0, 4).astype(jnp.float32)
    audio_feature = jax.random.normal(k3, (B * num_way, C), dtype=jnp.float32)
    loss_k = 0.5

    nloss, prec1, loss_list = video_loss_forward(
        x_in, label, audio_feature, loss_k, feature_loss=True
    )
    jax.block_until_ready(nloss)

    # validate against the f32 highest-precision reference (kernel matmul runs
    # bf16-in / f32-accumulate, hence the slightly relaxed tolerance)
    ref_nloss, ref_prec1, ref_mse, ref_floss = _reference_forward(
        x_in, label, audio_feature, loss_k
    )
    assert jnp.allclose(nloss, ref_nloss, atol=5e-3), (nloss, ref_nloss)
    assert jnp.allclose(prec1, ref_prec1, atol=5e-3), (prec1, ref_prec1)
    assert jnp.allclose(loss_list[0], ref_mse, atol=5e-3), (loss_list[0], ref_mse)
    assert jnp.allclose(loss_list[1], ref_floss, atol=5e-3), (loss_list[1], ref_floss)

    # feature_loss=False branch returns the plain mse loss
    nloss2, _, ll2 = video_loss_forward(
        x_in, label, audio_feature, loss_k, feature_loss=False
    )
    jax.block_until_ready(nloss2)
    assert jnp.allclose(nloss2, ll2[0])

    print("KERNEL_OK")
</pallas_src>

<mosaic_0001>
module attributes {stable_mosaic.version = 11 : i64} {
  func.func @kernel(%arg0: i32, %arg1: memref<2x8x32xf32, #tpu.memory_space<vmem>>, %arg2: memref<2x8x1xf32, #tpu.memory_space<vmem>>, %arg3: memref<2x8x1xf32, #tpu.memory_space<vmem>>, %arg4: memref<2x8x32xf32, #tpu.memory_space<vmem>>, %arg5: memref<4xf32, #tpu.memory_space<smem>>, %arg6: memref<3xf32, #tpu.memory_space<smem>>) attributes {dimension_semantics = [#tpu.dimension_semantics<arbitrary>], iteration_bounds = array<i64: 1>, scalar_prefetch = 0 : i64, scratch_operands = 1 : i64, tpu.core_type = #tpu.core_type<tc>, window_params = [{transform_indices = @transform_0, window_bounds = array<i64: 2, 8, 32>}, {transform_indices = @transform_1, window_bounds = array<i64: 2, 8, 1>}, {transform_indices = @transform_2, window_bounds = array<i64: 2, 8, 1>}, {transform_indices = @transform_3, window_bounds = array<i64: 2, 8, 32>}, {transform_indices = @transform_4, window_bounds = array<i64: 4>}]} {
    %c0_i32 = arith.constant 0 : i32
    %0 = arith.cmpi eq, %arg0, %c0_i32 : i32
    %1 = arith.extui %0 : i1 to i32
    %c0_i32_0 = arith.constant 0 : i32
    %2 = arith.cmpi ne, %1, %c0_i32_0 : i32
    scf.if %2 {
      %cst_28 = arith.constant 0.000000e+00 : f32
      %c0_29 = arith.constant 0 : index
      %85 = memref.load %arg6[%c0_29] : memref<3xf32, #tpu.memory_space<smem>>
      memref.store %cst_28, %arg6[%c0_29] : memref<3xf32, #tpu.memory_space<smem>>
      %cst_30 = arith.constant 0.000000e+00 : f32
      %c1_31 = arith.constant 1 : index
      %86 = memref.load %arg6[%c1_31] : memref<3xf32, #tpu.memory_space<smem>>
      memref.store %cst_30, %arg6[%c1_31] : memref<3xf32, #tpu.memory_space<smem>>
      %cst_32 = arith.constant 0.000000e+00 : f32
      %c2_33 = arith.constant 2 : index
      %87 = memref.load %arg6[%c2_33] : memref<3xf32, #tpu.memory_space<smem>>
      memref.store %cst_32, %arg6[%c2_33] : memref<3xf32, #tpu.memory_space<smem>>
    } else {
    }
    %c0 = arith.constant 0 : index
    %c0_1 = arith.constant 0 : index
    %c0_2 = arith.constant 0 : index
    %3 = vector.load %arg1[%c0, %c0_1, %c0_2] : memref<2x8x32xf32, #tpu.memory_space<vmem>>, vector<2x8x32xf32>
    %4 = vector.shape_cast %3 : vector<2x8x32xf32> to vector<16x32xf32>
    %c0_3 = arith.constant 0 : index
    %c0_4 = arith.constant 0 : index
    %c0_5 = arith.constant 0 : index
    %5 = vector.load %arg4[%c0_3, %c0_4, %c0_5] : memref<2x8x32xf32, #tpu.memory_space<vmem>>, vector<2x8x32xf32>
    %6 = vector.shape_cast %5 : vector<2x8x32xf32> to vector<16x32xf32>
    %c0_6 = arith.constant 0 : index
    %c0_7 = arith.constant 0 : index
    %c0_8 = arith.constant 0 : index
    %7 = vector.load %arg2[%c0_6, %c0_7, %c0_8] : memref<2x8x1xf32, #tpu.memory_space<vmem>>, vector<2x8x1xf32>
    %8 = vector.shape_cast %7 : vector<2x8x1xf32> to vector<16x1xf32>
    %c0_9 = arith.constant 0 : index
    %c0_10 = arith.constant 0 : index
    %c0_11 = arith.constant 0 : index
    %9 = vector.load %arg3[%c0_9, %c0_10, %c0_11] : memref<2x8x1xf32, #tpu.memory_space<vmem>>, vector<2x8x1xf32>
    %10 = vector.shape_cast %9 : vector<2x8x1xf32> to vector<16x1xf32>
    %11 = arith.mulf %4, %4 : vector<16x32xf32>
    %cst = arith.constant dense<0.000000e+00> : vector<16xf32>
    %12 = vector.multi_reduction <add>, %11, %cst [1] : vector<16x32xf32> to vector<16xf32>
    %13 = vector.shape_cast %12 : vector<16xf32> to vector<16x1xf32>
    %cst_12 = arith.constant 1.000000e-16 : f32
    %14 = vector.broadcast %cst_12 : f32 to vector<16x1xf32>
    %15 = arith.maximumf %13, %14 : vector<16x1xf32>
    %16 = math.rsqrt %15 : vector<16x1xf32>
    %17 = vector.broadcast %16 : vector<16x1xf32> to vector<16x32xf32>
    %18 = arith.mulf %4, %17 : vector<16x32xf32>
    %19 = arith.truncf %18 : vector<16x32xf32> to vector<16x32xbf16>
    %20 = tpu.transpose %18, [1, 0] : vector<16x32xf32> -> vector<32x16xf32>
    %21 = arith.truncf %20 : vector<32x16xf32> to vector<32x16xbf16>
    %cst_13 = arith.constant dense<0.000000e+00> : vector<16x16xf32>
    %22 = tpu.matmul %19, %21, %cst_13 {dimension_numbers = #tpu.dot_dimension_numbers<[1], [0], [0], [1], [0, 0, 1, 1], [], []>} : vector<16x32xbf16>, vector<32x16xbf16>, vector<16x16xf32> -> vector<16x16xf32>
    %23 = vector.shape_cast %10 : vector<16x1xf32> to vector<16x1xf32>
    %24 = vector.broadcast %23 : vector<16x1xf32> to vector<16x16xf32>
    %25 = tpu.transpose %24, [1, 0] : vector<16x16xf32> -> vector<16x16xf32>
    %26 = vector.shape_cast %8 : vector<16x1xf32> to vector<16x1xf32>
    %27 = vector.broadcast %26 : vector<16x1xf32> to vector<16x16xf32>
    %28 = tpu.transpose %27, [1, 0] : vector<16x16xf32> -> vector<16x16xf32>
    %29 = vector.broadcast %10 : vector<16x1xf32> to vector<16x16xf32>
    %30 = arith.cmpf oeq, %29, %25 : vector<16x16xf32>
    %31 = arith.extui %30 : vector<16x16xi1> to vector<16x16xi32>
    %32 = arith.sitofp %31 : vector<16x16xi32> to vector<16x16xf32>
    %33 = vector.broadcast %8 : vector<16x1xf32> to vector<16x16xf32>
    %34 = arith.cmpf oeq, %33, %28 : vector<16x16xf32>
    %cst_14 = arith.constant 0.000000e+00 : f32
    %35 = vector.broadcast %cst_14 : f32 to vector<16x16xf32>
    %36 = arith.select %34, %32, %35 : vector<16x16xi1>, vector<16x16xf32>
    %cst_15 = arith.constant dense<0.000000e+00> : vector<16xf32>
    %37 = vector.multi_reduction <add>, %36, %cst_15 [1] : vector<16x16xf32> to vector<16xf32>
    %38 = vector.shape_cast %37 : vector<16xf32> to vector<16x1xf32>
    %39 = math.rsqrt %38 : vector<16x1xf32>
    %40 = vector.shape_cast %39 : vector<16x1xf32> to vector<16x1xf32>
    %41 = vector.broadcast %40 : vector<16x1xf32> to vector<16x16xf32>
    %42 = tpu.transpose %41, [1, 0] : vector<16x16xf32> -> vector<16x16xf32>
    %43 = vector.broadcast %39 : vector<16x1xf32> to vector<16x16xf32>
    %44 = arith.mulf %43, %42 : vector<16x16xf32>
    %45 = arith.mulf %44, %32 : vector<16x16xf32>
    %46 = arith.subf %22, %36 : vector<16x16xf32>
    %c0_16 = arith.constant 0 : index
    %47 = memref.load %arg6[%c0_16] : memref<3xf32, #tpu.memory_space<smem>>
    %48 = arith.mulf %46, %46 : vector<16x16xf32>
    %49 = arith.mulf %48, %45 : vector<16x16xf32>
    %50 = vector.shape_cast %49 : vector<16x16xf32> to vector<1x16x16xf32>
    %cst_17 = arith.constant dense<0.000000e+00> : vector<1xf32>
    %51 = vector.multi_reduction <add>, %50, %cst_17 [1, 2] : vector<1x16x16xf32> to vector<1xf32>
    %52 = vector.shape_cast %51 : vector<1xf32> to vector<1x1x1xf32>
    %53 = vector.extract %52[0, 0, 0] : f32 from vector<1x1x1xf32>
    %54 = arith.addf %47, %53 : f32
    %c0_18 = arith.constant 0 : index
    %55 = memref.load %arg6[%c0_18] : memref<3xf32, #tpu.memory_space<smem>>
    memref.store %54, %arg6[%c0_18] : memref<3xf32, #tpu.memory_space<smem>>
    %c1 = arith.constant 1 : index
    %56 = memref.load %arg6[%c1] : memref<3xf32, #tpu.memory_space<smem>>
    %57 = math.absf %46 : vector<16x16xf32>
    %58 = arith.mulf %57, %32 : vector<16x16xf32>
    %59 = vector.shape_cast %58 : vector<16x16xf32> to vector<1x16x16xf32>
    %cst_19 = arith.constant dense<0.000000e+00> : vector<1xf32>
    %60 = vector.multi_reduction <add>, %59, %cst_19 [1, 2] : vector<1x16x16xf32> to vector<1xf32>
    %61 = vector.shape_cast %60 : vector<1xf32> to vector<1x1x1xf32>
    %62 = vector.extract %61[0, 0, 0] : f32 from vector<1x1x1xf32>
    %63 = arith.addf %56, %62 : f32
    %c1_20 = arith.constant 1 : index
    %64 = memref.load %arg6[%c1_20] : memref<3xf32, #tpu.memory_space<smem>>
    memref.store %63, %arg6[%c1_20] : memref<3xf32, #tpu.memory_space<smem>>
    %65 = arith.mulf %6, %6 : vector<16x32xf32>
    %cst_21 = arith.constant dense<0.000000e+00> : vector<16xf32>
    %66 = vector.multi_reduction <add>, %65, %cst_21 [1] : vector<16x32xf32> to vector<16xf32>
    %67 = vector.shape_cast %66 : vector<16xf32> to vector<16x1xf32>
    %cst_22 = arith.constant 1.000000e-16 : f32
    %68 = vector.broadcast %cst_22 : f32 to vector<16x1xf32>
    %69 = arith.maximumf %67, %68 : vector<16x1xf32>
    %70 = math.rsqrt %69 : vector<16x1xf32>
    %c2 = arith.constant 2 : index
    %71 = memref.load %arg6[%c2] : memref<3xf32, #tpu.memory_space<smem>>
    %72 = arith.mulf %18, %6 : vector<16x32xf32>
    %cst_23 = arith.constant dense<0.000000e+00> : vector<16xf32>
    %73 = vector.multi_reduction <add>, %72, %cst_23 [1] : vector<16x32xf32> to vector<16xf32>
    %74 = vector.shape_cast %73 : vector<16xf32> to vector<16x1xf32>
    %75 = arith.mulf %74, %70 : vector<16x1xf32>
    %76 = vector.shape_cast %75 : vector<16x1xf32> to vector<1x16x1xf32>
    %cst_24 = arith.constant dense<0.000000e+00> : vector<1xf32>
    %77 = vector.multi_reduction <add>, %76, %cst_24 [1, 2] : vector<1x16x1xf32> to vector<1xf32>
    %78 = vector.shape_cast %77 : vector<1xf32> to vector<1x1x1xf32>
    %79 = vector.extract %78[0, 0, 0] : f32 from vector<1x1x1xf32>
    %80 = arith.addf %71, %79 : f32
    %c2_25 = arith.constant 2 : index
    %81 = memref.load %arg6[%c2_25] : memref<3xf32, #tpu.memory_space<smem>>
    memref.store %80, %arg6[%c2_25] : memref<3xf32, #tpu.memory_space<smem>>
    %c0_i32_26 = arith.constant 0 : i32
    %82 = arith.cmpi eq, %arg0, %c0_i32_26 : i32
    %83 = arith.extui %82 : i1 to i32
    %c0_i32_27 = arith.constant 0 : i32
    %84 = arith.cmpi ne, %83, %c0_i32_27 : i32
    scf.if %84 {
      %c0_28 = arith.constant 0 : index
      %85 = memref.load %arg6[%c0_28] : memref<3xf32, #tpu.memory_space<smem>>
      %cst_29 = arith.constant 7.812500e-03 : f32
      %86 = arith.mulf %85, %cst_29 : f32
      %c1_30 = arith.constant 1 : index
      %87 = memref.load %arg6[%c1_30] : memref<3xf32, #tpu.memory_space<smem>>
      %cst_31 = arith.constant 7.812500e-03 : f32
      %88 = arith.mulf %87, %cst_31 : f32
      %c2_32 = arith.constant 2 : index
      %89 = memref.load %arg6[%c2_32] : memref<3xf32, #tpu.memory_space<smem>>
      %cst_33 = arith.constant 0.000000e+00 : f32
      %90 = arith.subf %cst_33, %89 : f32
      %cst_34 = arith.constant 6.250000e-02 : f32
      %91 = arith.mulf %90, %cst_34 : f32
      %c0_35 = arith.constant 0 : index
      %92 = memref.load %arg5[%c0_35] : memref<4xf32, #tpu.memory_space<smem>>
      memref.store %86, %arg5[%c0_35] : memref<4xf32, #tpu.memory_space<smem>>
      %c1_36 = arith.constant 1 : index
      %93 = memref.load %arg5[%c1_36] : memref<4xf32, #tpu.memory_space<smem>>
      memref.store %88, %arg5[%c1_36] : memref<4xf32, #tpu.memory_space<smem>>
      %c2_37 = arith.constant 2 : index
      %94 = memref.load %arg5[%c2_37] : memref<4xf32, #tpu.memory_space<smem>>
      memref.store %91, %arg5[%c2_37] : memref<4xf32, #tpu.memory_space<smem>>
      %cst_38 = arith.constant 5.000000e-01 : f32
      %95 = arith.mulf %cst_38, %86 : f32
      %96 = arith.addf %95, %91 : f32
      %c3 = arith.constant 3 : index
      %97 = memref.load %arg5[%c3] : memref<4xf32, #tpu.memory_space<smem>>
      memref.store %96, %arg5[%c3] : memref<4xf32, #tpu.memory_space<smem>>
    } else {
    }
    return
  }
  func.func @transform_0(%arg0: i32) -> (i32, i32, i32) {
    %c0_i32 = arith.constant 0 : i32
    %c0_i32_0 = arith.constant 0 : i32
    %c0_i32_1 = arith.constant 0 : i32
    return %arg0, %c0_i32, %c0_i32_0 : i32, i32, i32
  }
  func.func @transform_1(%arg0: i32) -> (i32, i32, i32) {
    %c0_i32 = arith.constant 0 : i32
    %c0_i32_0 = arith.constant 0 : i32
    %c0_i32_1 = arith.constant 0 : i32
    return %arg0, %c0_i32, %c0_i32_0 : i32, i32, i32
  }
  func.func @transform_2(%arg0: i32) -> (i32, i32, i32) {
    %c0_i32 = arith.constant 0 : i32
    %c0_i32_0 = arith.constant 0 : i32
    %c0_i32_1 = arith.constant 0 : i32
    return %arg0, %c0_i32, %c0_i32_0 : i32, i32, i32
  }
  func.func @transform_3(%arg0: i32) -> (i32, i32, i32) {
    %c0_i32 = arith.constant 0 : i32
    %c0_i32_0 = arith.constant 0 : i32
    %c0_i32_1 = arith.constant 0 : i32
    return %arg0, %c0_i32, %c0_i32_0 : i32, i32, i32
  }
  func.func @transform_4(%arg0: i32) -> i32 {
    %c0_i32 = arith.constant 0 : i32
    %c0_i32_0 = arith.constant 0 : i32
    return %c0_i32 : i32
  }
}

</mosaic_0001>

<llo_original>
// kernel: tpu_custom_call.1
$region0: #{tpu_custom_call.1}
  #allocation0 [shape = 'u32[]', space=smem, size = 0x4, offset = 0x4, fixed_abs, tag = 'smem constant byte address 0x4 - core index']
  #allocation1 [shape = 'u32[144,128]{1,0:T(1,128)}', space=vmem, size = 0x12000, scoped, tag = 'internal scratch']
  #allocation2 [shape = 'f32[3]{0:T(128)}', space=smem, size = 0x200, scoped, tag = 'scratch operand']
  %s0 = inlined_call_operand.vmem [shape: f32[2,8,32], index: 0, kind: input, shape index: {}]
  %s1 = inlined_call_operand.vmem [shape: f32[2,8,1], index: 1, kind: input, shape index: {}]
  %s2 = inlined_call_operand.vmem [shape: f32[2,8,1], index: 2, kind: input, shape index: {}]
  %s3 = inlined_call_operand.vmem [shape: f32[2,8,32], index: 3, kind: input, shape index: {}]
  %s4 = inlined_call_operand.hbm [shape: f32[4], index: 4, kind: output, shape index: {}]
  %s5 = sld [smem:[#allocation0]]
  $region34: #{tpu_custom_call.1} parent=0
    _
  %s7 = ssub.s32 1, %s5
  %s8 = scalar_select 0, %s7, %s5
  $region1: #{tpu_custom_call.1} parent=0
    #allocation3 [shape = 'u8[512]{0}', space=smem, size = 0x200, scoped, tag = 'output window, operand 0, single buffered']
    #allocation4 [shape = 's32[1]{0}', space=sflag, size = 0x4, scoped, tag = 'scoped memory for tpu_custom_call.1']
    %9 = vsyncpa [#allocation4], 0
    // Predicated region
    $region2: #{tpu_custom_call.1} parent=1 // pred_check
      _
    $region3: #{tpu_custom_call.1} parent=1 // pred_check_branch
      %11 = sbr.rel (0) target = $region5
    $region4: #{tpu_custom_call.1} parent=1 // pred_region
      _
    $region5: #{tpu_custom_call.1} parent=1 // pred_fallthru
      _
    // Predicated region
    $region6: #{tpu_custom_call.1} parent=1 // pred_check
      _
    $region7: #{tpu_custom_call.1} parent=1 // pred_check_branch
      %13 = sbr.rel (0) target = $region9
    $region8: #{tpu_custom_call.1} parent=1 // pred_region
      _
    $region9: #{tpu_custom_call.1} parent=1 // pred_fallthru
      _
    // Predicated region
    $region10: #{tpu_custom_call.1} parent=1 // pred_check
      _
    $region11: #{tpu_custom_call.1} parent=1 // pred_check_branch
      %15 = sbr.rel (0) target = $region13
    $region12: #{tpu_custom_call.1} parent=1 // pred_region
      _
    $region13: #{tpu_custom_call.1} parent=1 // pred_fallthru
      _
    // Predicated region
    $region14: #{tpu_custom_call.1} parent=1 // pred_check
      _
    $region15: #{tpu_custom_call.1} parent=1 // pred_check_branch
      %17 = sbr.rel (0) target = $region17
    $region16: #{tpu_custom_call.1} parent=1 // pred_region
      _
    $region17: #{tpu_custom_call.1} parent=1 // pred_fallthru
      _
    %p19 = scmp.eq.s32.totalorder 0, 0
    // Predicated region
    $region18: #{tpu_custom_call.1} parent=1 // pred_check
      %p20 = pneg %p19
    $region19: #{tpu_custom_call.1} parent=1 // pred_check_branch
      %22 = sbr.rel (%p20) target = $region21
    $region20: #{tpu_custom_call.1} parent=1 // pred_region
      %s23 = scalar_lea.smem [#allocation2], 0
      %24 = sst [smem:[%s23]] 0.0
      %s25 = scalar_lea.smem [#allocation2], 1
      %26 = sst [smem:[%s25]] 0.0
      %s27 = scalar_lea.smem [#allocation2], 2
      %28 = sst [smem:[%s27]] 0.0
    $region21: #{tpu_custom_call.1} parent=1 // pred_fallthru
      _
    %v29 = vld [vmem:[%s0] sm:$0xff]
    %v30 = vld [vmem:[%s0 + $0x8] sm:$0xff]
    %v31 = vld [vmem:[%s3] sm:$0xff]
    %v32 = vld [vmem:[%s3 + $0x8] sm:$0xff]
    %v33 = vld [vmem:[%s1] sm:$0xff]
    %v34 = vld [vmem:[%s1 + $0x8] sm:$0xff]
    %v35 = vld [vmem:[%s2] sm:$0xff]
    %v36 = vld [vmem:[%s2 + $0x8] sm:$0xff]
    %v37 = vmul.f32 %v29, %v29
    %v38 = vmul.f32 %v30, %v30
    %vm39 = vcmask 261120
    %v40 = vsel %vm39, %v37, 0.0
    %41 = vadd.xlane.f32.xlu0 %v40
    %v42 = vpop.xlane.xlu0 %41
    %v43 = vsel %vm39, %v38, 0.0
    %44 = vadd.xlane.f32.xlu0 %v43
    %v45 = vpop.xlane.xlu0 %44
    %v46 = vmax.f32 %v42, 1e-16
    %v47 = vmax.f32 %v45, 1e-16
    %v48 = vrsqrt.pop %v46
    %v49 = vrsqrt.pop %v47
    %v50 = vmul.f32 %v29, %v48
    %v51 = vmul.f32 %v30, %v49
    %v52 = vpack.c.bf16 %v51, %v50
    %53 = vxpose.xlu0.b32.start [1/16] %v50, 128
    %54 = vxpose.xlu0.b32.cont [2/16] %v51, 128
    %55 = vxpose.xlu0.b32.cont [3/16] 0.0, 128
    %56 = vxpose.xlu0.b32.cont [4/16] 0.0, 128
    %57 = vxpose.xlu0.b32.cont [5/16] 0.0, 128
    %58 = vxpose.xlu0.b32.cont [6/16] 0.0, 128
    %59 = vxpose.xlu0.b32.cont [7/16] 0.0, 128
    %60 = vxpose.xlu0.b32.cont [8/16] 0.0, 128
    %61 = vxpose.xlu0.b32.cont [9/16] 0.0, 128
    %62 = vxpose.xlu0.b32.cont [10/16] 0.0, 128
    %63 = vxpose.xlu0.b32.cont [11/16] 0.0, 128
    %64 = vxpose.xlu0.b32.cont [12/16] 0.0, 128
    %65 = vxpose.xlu0.b32.cont [13/16] 0.0, 128
    %66 = vxpose.xlu0.b32.cont [14/16] 0.0, 128
    %67 = vxpose.xlu0.b32.cont [15/16] 0.0, 128
    %68 = vxpose.xlu0.b32.end [16/16] 0.0, 128
    %v69 = vpop.trf.xlu0
    %v70 = vpop.trf.xlu0
    %v71 = vpop.trf.xlu0
    %v72 = vpop.trf.xlu0
    %v73 = vpop.trf.xlu0
    %v74 = vpop.trf.xlu0
    %v75 = vpop.trf.xlu0
    %v76 = vpop.trf.xlu0
    %v77 = vpop.trf.xlu0
    %v78 = vpop.trf.xlu0
    %v79 = vpop.trf.xlu0
    %v80 = vpop.trf.xlu0
    %v81 = vpop.trf.xlu0
    %v82 = vpop.trf.xlu0
    %v83 = vpop.trf.xlu0
    %v84 = vpop.trf.xlu0
    %v85 = vpack.c.bf16 %v70, %v69
    %v86 = vpack.c.bf16 %v72, %v71
    %v88 = vsel %vm39, %v52, 0
    %90 = vmatprep.subr.bf16.mxu0 0
    %91 = vmatpush1.bf16.msra.mxu0 %v85
    %92 = vmatprep.subr.bf16.mxu0 0
    %93 = vmatpush1.bf16.msra.mxu0 %v86
    %94 = vmatprep.subr.bf16.mxu0 0
    %95 = vmatpush1.bf16.msra.mxu0 0
    %96 = vmatprep.subr.bf16.mxu0 0
    %97 = vmatpush1.bf16.msra.mxu0 0
    %98 = vmatprep.subr.bf16.mxu0 0
    %99 = vmatpush1.bf16.msra.mxu0 0
    %100 = vmatprep.subr.bf16.mxu0 0
    %101 = vmatpush1.bf16.msra.mxu0 0
    %102 = vmatprep.subr.bf16.mxu0 0
    %103 = vmatpush1.bf16.msra.mxu0 0
    %104 = vmatprep.subr.bf16.mxu0 0
    %105 = vmatpush1.bf16.msra.mxu0 0
    %106 = vmatprep.subr.bf16.mxu0 0
    %107 = vmatpush1.bf16.msra.mxu0 0
    %108 = vmatprep.subr.bf16.mxu0 0
    %109 = vmatpush1.bf16.msra.mxu0 0
    %110 = vmatprep.subr.bf16.mxu0 0
    %111 = vmatpush1.bf16.msra.mxu0 0
    %112 = vmatprep.subr.bf16.mxu0 0
    %113 = vmatpush1.bf16.msra.mxu0 0
    %114 = vmatprep.subr.bf16.mxu0 0
    %115 = vmatpush1.bf16.msra.mxu0 0
    %116 = vmatprep.subr.bf16.mxu0 0
    %117 = vmatpush1.bf16.msra.mxu0 0
    %118 = vmatprep.subr.bf16.mxu0 0
    %119 = vmatpush1.bf16.msra.mxu0 0
    %120 = vmatprep.subr.bf16.mxu0 0
    %121 = vmatpush1.bf16.msra.mxu0 0
    %122 = vmatprep.mubr.bf16.mxu0 0
    %123 = vmatmul.mubr.bf16.gmra.mrb[0].mxu0 %v88
    %v124 = vpop.f32.mrb[0].mxu0
    %v125 = vadd.f32 0.0, %v124
    %v126 = vpop.f32.mrb[0].mxu0
    %v127 = vpop.f32.mrb[0].mxu0
    %v128 = vadd.f32 0.0, %v127
    %v129 = vpop.f32.mrb[0].mxu0
    %130 = vdwg.mxu0
    %132 = vset.pattern.permute.xlu0 0
    %133 = vperm.xlu0 %132, %v35
    %v134 = vpop.permute.xlu0 %133
    %137 = vset.pattern.permute.xlu0 0
    %138 = vperm.xlu0 %137, %v36
    %v139 = vpop.permute.xlu0 %138
    %141 = vxpose.xlu0.b32.start [1/16] %v134, 128
    %142 = vxpose.xlu0.b32.cont [2/16] %v139, 128
    %143 = vxpose.xlu0.b32.cont [3/16] 0.0, 128
    %144 = vxpose.xlu0.b32.cont [4/16] 0.0, 128
    %145 = vxpose.xlu0.b32.cont [5/16] 0.0, 128
    %146 = vxpose.xlu0.b32.cont [6/16] 0.0, 128
    %147 = vxpose.xlu0.b32.cont [7/16] 0.0, 128
    %148 = vxpose.xlu0.b32.cont [8/16] 0.0, 128
    %149 = vxpose.xlu0.b32.cont [9/16] 0.0, 128
    %150 = vxpose.xlu0.b32.cont [10/16] 0.0, 128
    %151 = vxpose.xlu0.b32.cont [11/16] 0.0, 128
    %152 = vxpose.xlu0.b32.cont [12/16] 0.0, 128
    %153 = vxpose.xlu0.b32.cont [13/16] 0.0, 128
    %154 = vxpose.xlu0.b32.cont [14/16] 0.0, 128
    %155 = vxpose.xlu0.b32.cont [15/16] 0.0, 128
    %156 = vxpose.xlu0.b32.end [16/16] 0.0, 128
    %v157 = vpop.trf.xlu0
    %v158 = vpop.trf.xlu0
    %v159 = vpop.trf.xlu0
    %v160 = vpop.trf.xlu0
    %v161 = vpop.trf.xlu0
    %v162 = vpop.trf.xlu0
    %v163 = vpop.trf.xlu0
    %v164 = vpop.trf.xlu0
    %v165 = vpop.trf.xlu0
    %v166 = vpop.trf.xlu0
    %v167 = vpop.trf.xlu0
    %v168 = vpop.trf.xlu0
    %v169 = vpop.trf.xlu0
    %v170 = vpop.trf.xlu0
    %v171 = vpop.trf.xlu0
    %v172 = vpop.trf.xlu0
    %174 = vset.pattern.permute.xlu0 0
    %175 = vperm.xlu0 %174, %v33
    %v176 = vpop.permute.xlu0 %175
    %179 = vset.pattern.permute.xlu0 0
    %180 = vperm.xlu0 %179, %v34
    %v181 = vpop.permute.xlu0 %180
    %183 = vxpose.xlu0.b32.start [1/16] %v176, 128
    %184 = vxpose.xlu0.b32.cont [2/16] %v181, 128
    %185 = vxpose.xlu0.b32.cont [3/16] 0.0, 128
    %186 = vxpose.xlu0.b32.cont [4/16] 0.0, 128
    %187 = vxpose.xlu0.b32.cont [5/16] 0.0, 128
    %188 = vxpose.xlu0.b32.cont [6/16] 0.0, 128
    %189 = vxpose.xlu0.b32.cont [7/16] 0.0, 128
    %190 = vxpose.xlu0.b32.cont [8/16] 0.0, 128
    %191 = vxpose.xlu0.b32.cont [9/16] 0.0, 128
    %192 = vxpose.xlu0.b32.cont [10/16] 0.0, 128
    %193 = vxpose.xlu0.b32.cont [11/16] 0.0, 128
    %194 = vxpose.xlu0.b32.cont [12/16] 0.0, 128
    %195 = vxpose.xlu0.b32.cont [13/16] 0.0, 128
    %196 = vxpose.xlu0.b32.cont [14/16] 0.0, 128
    %197 = vxpose.xlu0.b32.cont [15/16] 0.0, 128
    %198 = vxpose.xlu0.b32.end [16/16] 0.0, 128
    %v199 = vpop.trf.xlu0
    %v200 = vpop.trf.xlu0
    %v201 = vpop.trf.xlu0
    %v202 = vpop.trf.xlu0
    %v203 = vpop.trf.xlu0
    %v204 = vpop.trf.xlu0
    %v205 = vpop.trf.xlu0
    %v206 = vpop.trf.xlu0
    %v207 = vpop.trf.xlu0
    %v208 = vpop.trf.xlu0
    %v209 = vpop.trf.xlu0
    %v210 = vpop.trf.xlu0
    %v211 = vpop.trf.xlu0
    %v212 = vpop.trf.xlu0
    %v213 = vpop.trf.xlu0
    %v214 = vpop.trf.xlu0
    %vm215 = vcmp.eq.f32.partialorder %v134, %v157
    %vm216 = vcmp.eq.f32.partialorder %v139, %v158
    %v217 = vsel %vm215, 1, 0
    %v218 = vsel %vm216, 1, 0
    %v219 = vcvt.s32.f32 %v217
    %v220 = vcvt.s32.f32 %v218
    %vm221 = vcmp.eq.f32.partialorder %v176, %v199
    %vm222 = vcmp.eq.f32.partialorder %v181, %v200
    %v223 = vsel %vm221, %v219, 0.0
    %v224 = vsel %vm222, %v220, 0.0
    %vm225 = vcmask 130048
    %v226 = vsel %vm225, %v223, 0.0
    %227 = vadd.xlane.f32.xlu0 %v226
    %v228 = vpop.xlane.xlu0 %227
    %v229 = vsel %vm225, %v224, 0.0
    %230 = vadd.xlane.f32.xlu0 %v229
    %v231 = vpop.xlane.xlu0 %230
    %v232 = vrsqrt.pop %v228
    %v233 = vrsqrt.pop %v231
    %234 = vxpose.xlu0.b32.start [1/16] %v232, 128
    %235 = vxpose.xlu0.b32.cont [2/16] %v233, 128
    %236 = vxpose.xlu0.b32.cont [3/16] 0.0, 128
    %237 = vxpose.xlu0.b32.cont [4/16] 0.0, 128
    %238 = vxpose.xlu0.b32.cont [5/16] 0.0, 128
    %239 = vxpose.xlu0.b32.cont [6/16] 0.0, 128
    %240 = vxpose.xlu0.b32.cont [7/16] 0.0, 128
    %241 = vxpose.xlu0.b32.cont [8/16] 0.0, 128
    %242 = vxpose.xlu0.b32.cont [9/16] 0.0, 128
    %243 = vxpose.xlu0.b32.cont [10/16] 0.0, 128
    %244 = vxpose.xlu0.b32.cont [11/16] 0.0, 128
    %245 = vxpose.xlu0.b32.cont [12/16] 0.0, 128
    %246 = vxpose.xlu0.b32.cont [13/16] 0.0, 128
    %247 = vxpose.xlu0.b32.cont [14/16] 0.0, 128
    %248 = vxpose.xlu0.b32.cont [15/16] 0.0, 128
    %249 = vxpose.xlu0.b32.end [16/16] 0.0, 128
    %v250 = vpop.trf.xlu0
    %v251 = vpop.trf.xlu0
    %v252 = vpop.trf.xlu0
    %v253 = vpop.trf.xlu0
    %v254 = vpop.trf.xlu0
    %v255 = vpop.trf.xlu0
    %v256 = vpop.trf.xlu0
    %v257 = vpop.trf.xlu0
    %v258 = vpop.trf.xlu0
    %v259 = vpop.trf.xlu0
    %v260 = vpop.trf.xlu0
    %v261 = vpop.trf.xlu0
    %v262 = vpop.trf.xlu0
    %v263 = vpop.trf.xlu0
    %v264 = vpop.trf.xlu0
    %v265 = vpop.trf.xlu0
    %v266 = vmul.f32 %v232, %v250
    %v267 = vmul.f32 %v233, %v251
    %v268 = vmul.f32 %v266, %v219
    %v269 = vmul.f32 %v267, %v220
    %v270 = vsub.f32 %v125, %v223
    %v271 = vsub.f32 %v128, %v224
    %s272 = sld [smem:[#allocation2]]
    %v273 = vmul.f32 %v270, %v270
    %v274 = vmul.f32 %v271, %v271
    %v275 = vmul.f32 %v273, %v268
    %v276 = vmul.f32 %v274, %v269
    %v277 = vsel %vm225, %v275, 0.0
    %v278 = vsel %vm225, %v276, 0.0
    %v279 = vadd.f32 %v277, %v278
    %280 = vadd.xlane.f32.xlu0 %v279
    %v281 = vpop.xlane.xlu0 %280
    %v282 = vrot.slane %v281, 4
    %v283 = vadd.f32 %v281, %v282
    %v284 = vrot.slane %v283, 2
    %v285 = vadd.f32 %v283, %v284
    %v286 = vrot.slane %v285, 1
    %v287 = vadd.f32 %v285, %v286
    %s288 = vtos %v287
    %s289 = sadd.f32 %s272, %s288
    %s290 = scalar_lea.smem [#allocation2], 0
    %291 = sst [smem:[%s290]] %s289
    %s292 = sld [smem:[#allocation2 + $0x1]]
    %v293 = vand.u32 2147483647, %v270
    %v294 = vand.u32 2147483647, %v271
    %v295 = vmul.f32 %v293, %v219
    %v296 = vmul.f32 %v294, %v220
    %v297 = vsel %vm225, %v295, 0.0
    %v298 = vsel %vm225, %v296, 0.0
    %v299 = vadd.f32 %v297, %v298
    %300 = vadd.xlane.f32.xlu0 %v299
    %v301 = vpop.xlane.xlu0 %300
    %v302 = vrot.slane %v301, 4
    %v303 = vadd.f32 %v301, %v302
    %v304 = vrot.slane %v303, 2
    %v305 = vadd.f32 %v303, %v304
    %v306 = vrot.slane %v305, 1
    %v307 = vadd.f32 %v305, %v306
    %s308 = vtos %v307
    %s309 = sadd.f32 %s292, %s308
    %s310 = scalar_lea.smem [#allocation2], 1
    %311 = sst [smem:[%s310]] %s309
    %v312 = vmul.f32 %v31, %v31
    %v313 = vmul.f32 %v32, %v32
    %v314 = vsel %vm39, %v312, 0.0
    %315 = vadd.xlane.f32.xlu0 %v314
    %v316 = vpop.xlane.xlu0 %315
    %v317 = vsel %vm39, %v313, 0.0
    %318 = vadd.xlane.f32.xlu0 %v317
    %v319 = vpop.xlane.xlu0 %318
    %v320 = vmax.f32 %v316, 1e-16
    %v321 = vmax.f32 %v319, 1e-16
    %v322 = vrsqrt.pop %v320
    %v323 = vrsqrt.pop %v321
    %s324 = sld [smem:[#allocation2 + $0x2]]
    %v325 = vmul.f32 %v50, %v31
    %v326 = vmul.f32 %v51, %v32
    %v327 = vsel %vm39, %v325, 0.0
    %328 = vadd.xlane.f32.xlu0 %v327
    %v329 = vpop.xlane.xlu0 %328
    %v330 = vsel %vm39, %v326, 0.0
    %331 = vadd.xlane.f32.xlu0 %v330
    %v332 = vpop.xlane.xlu0 %331
    %v333 = vmul.f32 %v329, %v322
    %v334 = vmul.f32 %v332, %v323
    %vm335 = vcmask 7168
    %v336 = vsel %vm335, %v333, 0.0
    %v337 = vsel %vm335, %v334, 0.0
    %v338 = vadd.f32 %v336, %v337
    %339 = vadd.xlane.f32.xlu0 %v338
    %v340 = vpop.xlane.xlu0 %339
    %v341 = vrot.slane %v340, 4
    %v342 = vadd.f32 %v340, %v341
    %v343 = vrot.slane %v342, 2
    %v344 = vadd.f32 %v342, %v343
    %v345 = vrot.slane %v344, 1
    %v346 = vadd.f32 %v344, %v345
    %s347 = vtos %v346
    %s348 = sadd.f32 %s324, %s347
    %s349 = scalar_lea.smem [#allocation2], 2
    %350 = sst [smem:[%s349]] %s348
    // Predicated region
    $region22: #{tpu_custom_call.1} parent=1 // pred_check
      %p351 = pneg %p19
    $region23: #{tpu_custom_call.1} parent=1 // pred_check_branch
      %353 = sbr.rel (%p351) target = $region25
    $region24: #{tpu_custom_call.1} parent=1 // pred_region
      %s354 = sld [smem:[#allocation2]]
      %s355 = smul.f32 %s354, 0.0078125
      %s356 = sld [smem:[#allocation2 + $0x1]]
      %s357 = smul.f32 %s356, 0.0078125
      %s358 = sld [smem:[#allocation2 + $0x2]]
      %s359 = ssub.f32 0.0, %s358
      %s360 = smul.f32 %s359, 0.0625
      %s361 = scalar_lea.smem [#allocation3], 0
      %362 = sst [smem:[%s361]] %s355
      %s363 = scalar_lea.smem [#allocation3], 1
      %364 = sst [smem:[%s363]] %s357
      %s365 = scalar_lea.smem [#allocation3], 2
      %366 = sst [smem:[%s365]] %s360
      %s367 = smul.f32 %s355, 0.5
      %s368 = sadd.f32 %s367, %s360
      %s369 = scalar_lea.smem [#allocation3], 3
      %370 = sst [smem:[%s369]] %s368
    $region25: #{tpu_custom_call.1} parent=1 // pred_fallthru
      _
    // Predicated region
    $region26: #{tpu_custom_call.1} parent=1 // pred_check
      _
    $region27: #{tpu_custom_call.1} parent=1 // pred_check_branch
      %372 = sbr.rel (0) target = $region29
    $region28: #{tpu_custom_call.1} parent=1 // pred_region
      %s374 = ssub.s32 16, 16
      %375 = vsyncadd [#allocation4], %s374
      %378 = dma.smem_to_hbm [#allocation3], 16, %s4, [#allocation4]
    $region29: #{tpu_custom_call.1} parent=1 // pred_fallthru
      _
    // Predicated region
    $region30: #{tpu_custom_call.1} parent=1 // pred_check
      _
    $region31: #{tpu_custom_call.1} parent=1 // pred_check_branch
      %380 = sbr.rel (0) target = $region33
    $region32: #{tpu_custom_call.1} parent=1 // pred_region
      %381 = dma.done [#allocation4], 16
    $region33: #{tpu_custom_call.1} parent=1 // pred_fallthru
      _
    %382 = sfence
    %383 = vsyncpa [#allocation4], 1

</llo_original>
